<compile_context>
chip_gen: v5e
topology: v5e:2x2
jax: 0.10.0
libtpu: 0.0.40
codegen_flags: <defaults>
</compile_context>

<pallas_src>
import jax
import jax.numpy as jnp
from jax.experimental import pallas as pl
from jax.experimental.pallas import tpu as pltpu


def _round_up(x, m):
    return (x + m - 1) // m * m


def _choose_row_tile(batch, cap=1024):
    """Row tile: multiple of 8, <= cap.  For small/medium batches split into >=2 grid
    steps so v7x's two TensorCores both get work; for large batches use the cap so the
    per-step pipeline overhead is amortized and VMEM stays comfortably bounded."""
    bp = _round_up(batch, 8)
    if bp <= 8:
        return 8
    if bp <= 2 * cap:
        return _round_up(pl.cdiv(bp, 2), 8)
    return cap


# --------------------------------------------------------------------------------------
# Parameter packing (done ONCE, outside the hot path).
# fc_w: (t_dim, 4*c_dim) == nn.Linear.weight.T ;  fc_b: (4*c_dim,)
# Packed layout: four column groups, each zero-padded to Cp = round_up(c_dim, 128):
#   [W_mu | W_logvar | W_mu_gate | W_logvar_gate]   -> (t_dim, 4*Cp)
# so every in-kernel slice / store lands on a 128-lane boundary.
# --------------------------------------------------------------------------------------
def pack_ca_net_params(fc_w, fc_b, c_dim, compute_dtype=jnp.bfloat16):
    t_dim, c4 = fc_w.shape
    assert c4 == 4 * c_dim
    cp = _round_up(c_dim, 128)
    pad_c = cp - c_dim

    w_groups = [fc_w[:, i * c_dim:(i + 1) * c_dim] for i in range(4)]
    w_packed = jnp.concatenate(
        [jnp.pad(g, ((0, 0), (0, pad_c))) for g in w_groups], axis=1
    ).astype(compute_dtype)                                           # (t_dim, 4*Cp), bf16

    b_groups = [fc_b[i * c_dim:(i + 1) * c_dim] for i in range(4)]
    b_packed = jnp.concatenate(
        [jnp.pad(g, (0, pad_c)) for g in b_groups]
    ).reshape(1, 4 * cp).astype(jnp.float32)                          # (1, 4*Cp), f32

    return {"w_packed": w_packed, "b_packed": b_packed}


# --------------------------------------------------------------------------------------
# Fused kernel: Linear -> GLU -> split -> reparametrize, one batch row tile per grid step.
# All lane slices / stores are at multiples of Cp (=128-aligned); output is one
# lane-dense slab (tb, 3*Cp) = [c_code | mu | logvar].
# --------------------------------------------------------------------------------------
def _ca_net_kernel(x_ref, w_ref, b_ref, eps_ref, out_ref):
    cp = out_ref.shape[1] // 3

    # MXU matmul, f32 accumulation (inputs are bf16 in VMEM).
    y = jnp.dot(x_ref[...], w_ref[...], preferred_element_type=jnp.float32)
    y = y + b_ref[...]                                    # (tb, 4*Cp), f32

    lin_mu = y[:, 0 * cp:1 * cp]                          # 128-aligned vreg-tile selects
    lin_lv = y[:, 1 * cp:2 * cp]
    gate_mu = jax.nn.sigmoid(y[:, 2 * cp:3 * cp])         # EUP
    gate_lv = jax.nn.sigmoid(y[:, 3 * cp:4 * cp])

    mu = lin_mu * gate_mu                                 # GLU halves
    logvar = lin_lv * gate_lv
    std = jnp.exp(0.5 * logvar)                           # EUP
    c_code = eps_ref[...].astype(jnp.float32) * std + mu

    # Single lane-dense packed output slab; each store is a full unmasked 128-wide vst.
    out_ref[:, 0 * cp:1 * cp] = c_code
    out_ref[:, 1 * cp:2 * cp] = mu
    out_ref[:, 2 * cp:3 * cp] = logvar


def ca_net_forward(w_packed, b_packed, text_embedding, eps, *, c_dim):
    """w_packed: (t_dim, 4*Cp) bf16, b_packed: (1, 4*Cp) f32 (from pack_ca_net_params).
    text_embedding: (B, t_dim);  eps: (B, c_dim) or (B, Cp) noise.
    Returns (c_code, mu, logvar), each (B, c_dim) float32."""
    B, T = text_embedding.shape
    four_cp = w_packed.shape[1]
    cp = four_cp // 4
    compute_dtype = w_packed.dtype

    x = text_embedding.astype(compute_dtype)
    e = eps
    if e.shape[1] != cp:
        # Tiny lane pad (callers can pass (B, Cp) noise directly to skip it entirely).
        e = jnp.pad(e, ((0, 0), (0, cp - e.shape[1])))
    e = e.astype(compute_dtype)

    tb = _choose_row_tile(B)
    grid = (pl.cdiv(B, tb),)      # ragged last tile is masked by Pallas; rows independent

    itemsize = jnp.dtype(compute_dtype).itemsize
    bytes_accessed = (B * T * itemsize + B * cp * itemsize          # x, eps
                      + T * four_cp * itemsize + four_cp * 4        # W, b
                      + B * 3 * cp * 4)                             # packed output
    cost = pl.CostEstimate(flops=2 * B * T * four_cp + 6 * B * cp,
                           transcendentals=3 * B * cp,
                           bytes_accessed=bytes_accessed)

    out = pl.pallas_call(
        _ca_net_kernel,
        out_shape=jax.ShapeDtypeStruct((B, 3 * cp), jnp.float32),
        grid=grid,
        in_specs=[pl.BlockSpec((tb, T), lambda i: (i, 0)),         # text rows (tiled)
                  pl.BlockSpec((T, four_cp), lambda i: (0, 0)),    # packed weight (bcast)
                  pl.BlockSpec((1, four_cp), lambda i: (0, 0)),    # packed bias (bcast)
                  pl.BlockSpec((tb, cp), lambda i: (i, 0))],       # eps rows (tiled)
        out_specs=pl.BlockSpec((tb, 3 * cp), lambda i: (i, 0)),    # lane-dense slab
        compiler_params=pltpu.CompilerParams(
            dimension_semantics=("parallel",)),                    # batch tiles independent
        cost_estimate=cost,
    )(x, w_packed, b_packed, e)

    # Cheap XLA slices split the packed slab back into the three module outputs.
    c_code = out[:, 0 * cp:0 * cp + c_dim]
    mu = out[:, 1 * cp:1 * cp + c_dim]
    logvar = out[:, 2 * cp:2 * cp + c_dim]
    return c_code, mu, logvar


# --------------------------------------------------------------------------------------
# Deterministic synthetic parameters (nn.Linear weight stored transposed: (in, out)).
# --------------------------------------------------------------------------------------
def init_params(key, t_dim, c_dim):
    k1, k2 = jax.random.split(key)
    return {"fc_w": 0.05 * jax.random.normal(k1, (t_dim, 4 * c_dim), jnp.float32),
            "fc_b": 0.01 * jax.random.normal(k2, (4 * c_dim,), jnp.float32)}


if __name__ == "__main__":
    # Small shapes consistent with CA_NET: batch=8, t_dim=32, c_dim=32.
    B, t_dim, c_dim = 8, 32, 32

    key = jax.random.PRNGKey(0)
    kp, kx, ke = jax.random.split(key, 3)
    params = init_params(kp, t_dim, c_dim)
    packed = pack_ca_net_params(params["fc_w"], params["fc_b"], c_dim)

    # bf16 operands in HBM (kernel accumulates in f32 on the MXU).
    text_embedding = jax.random.normal(kx, (B, t_dim), jnp.float32).astype(jnp.bfloat16)
    eps = jax.random.normal(ke, (B, c_dim), jnp.float32).astype(jnp.bfloat16)  # explicit eps

    fwd = jax.jit(ca_net_forward, static_argnames=("c_dim",))
    c_code, mu, logvar = fwd(packed["w_packed"], packed["b_packed"],
                             text_embedding, eps, c_dim=c_dim)
    jax.block_until_ready((c_code, mu, logvar))

    # Pure-JAX f32 reference built from the SAME bf16-rounded operands.
    xf = text_embedding.astype(jnp.float32)
    wf = params["fc_w"].astype(jnp.bfloat16).astype(jnp.float32)
    ef = eps.astype(jnp.float32)
    y_ref = xf @ wf + params["fc_b"]
    glu_ref = y_ref[:, :2 * c_dim] * jax.nn.sigmoid(y_ref[:, 2 * c_dim:])
    mu_ref = glu_ref[:, :c_dim]
    lv_ref = glu_ref[:, c_dim:]
    c_ref = ef * jnp.exp(0.5 * lv_ref) + mu_ref

    assert c_code.shape == (B, c_dim) and mu.shape == (B, c_dim) and logvar.shape == (B, c_dim)
    assert bool(jnp.all(jnp.isfinite(c_code)))
    assert bool(jnp.allclose(mu, mu_ref, rtol=2e-2, atol=2e-2))
    assert bool(jnp.allclose(logvar, lv_ref, rtol=2e-2, atol=2e-2))
    assert bool(jnp.allclose(c_code, c_ref, rtol=2e-2, atol=2e-2))
    print("KERNEL_OK")
</pallas_src>

<mosaic_0001>
module attributes {stable_mosaic.version = 11 : i64} {
  func.func @_ca_net_kernel(%arg0: i32, %arg1: memref<8x32xbf16, #tpu.memory_space<vmem>>, %arg2: memref<32x512xbf16, #tpu.memory_space<vmem>>, %arg3: memref<1x512xf32, #tpu.memory_space<vmem>>, %arg4: memref<8x128xbf16, #tpu.memory_space<vmem>>, %arg5: memref<8x384xf32, #tpu.memory_space<vmem>>) attributes {dimension_semantics = [#tpu.dimension_semantics<parallel>], iteration_bounds = array<i64: 1>, scalar_prefetch = 0 : i64, scratch_operands = 0 : i64, tpu.core_type = #tpu.core_type<tc>, window_params = [{transform_indices = @transform_0, window_bounds = array<i64: 8, 32>}, {pipeline_mode = #tpu.pipeline_mode<synchronous>, transform_indices = @transform_1, window_bounds = array<i64: 32, 512>}, {pipeline_mode = #tpu.pipeline_mode<synchronous>, transform_indices = @transform_2, window_bounds = array<i64: 1, 512>}, {transform_indices = @transform_3, window_bounds = array<i64: 8, 128>}, {transform_indices = @transform_4, window_bounds = array<i64: 8, 384>}]} {
    %c0 = arith.constant 0 : index
    %c0_0 = arith.constant 0 : index
    %0 = vector.load %arg1[%c0, %c0_0] : memref<8x32xbf16, #tpu.memory_space<vmem>>, vector<8x32xbf16>
    %c0_1 = arith.constant 0 : index
    %c0_2 = arith.constant 0 : index
    %1 = vector.load %arg2[%c0_1, %c0_2] : memref<32x512xbf16, #tpu.memory_space<vmem>>, vector<32x512xbf16>
    %cst = arith.constant dense<0.000000e+00> : vector<8x512xf32>
    %2 = tpu.matmul %0, %1, %cst {dimension_numbers = #tpu.dot_dimension_numbers<[1], [0], [0], [1], [0, 0, 1, 1], [], []>} : vector<8x32xbf16>, vector<32x512xbf16>, vector<8x512xf32> -> vector<8x512xf32>
    %c0_3 = arith.constant 0 : index
    %c0_4 = arith.constant 0 : index
    %3 = vector.load %arg3[%c0_3, %c0_4] : memref<1x512xf32, #tpu.memory_space<vmem>>, vector<1x512xf32>
    %4 = vector.broadcast %3 : vector<1x512xf32> to vector<8x512xf32>
    %5 = arith.addf %2, %4 : vector<8x512xf32>
    %6 = vector.extract_strided_slice %5 {offsets = [0, 0], sizes = [8, 128], strides = [1, 1]} : vector<8x512xf32> to vector<8x128xf32>
    %7 = vector.extract_strided_slice %5 {offsets = [0, 128], sizes = [8, 128], strides = [1, 1]} : vector<8x512xf32> to vector<8x128xf32>
    %8 = vector.extract_strided_slice %5 {offsets = [0, 256], sizes = [8, 128], strides = [1, 1]} : vector<8x512xf32> to vector<8x128xf32>
    %9 = arith.negf %8 : vector<8x128xf32>
    %10 = math.exp %9 : vector<8x128xf32>
    %cst_5 = arith.constant 1.000000e+00 : f32
    %11 = vector.broadcast %cst_5 : f32 to vector<8x128xf32>
    %12 = arith.addf %11, %10 : vector<8x128xf32>
    %13 = arith.divf %11, %12 : vector<8x128xf32>
    %14 = vector.extract_strided_slice %5 {offsets = [0, 384], sizes = [8, 128], strides = [1, 1]} : vector<8x512xf32> to vector<8x128xf32>
    %15 = arith.negf %14 : vector<8x128xf32>
    %16 = math.exp %15 : vector<8x128xf32>
    %cst_6 = arith.constant 1.000000e+00 : f32
    %17 = vector.broadcast %cst_6 : f32 to vector<8x128xf32>
    %18 = arith.addf %17, %16 : vector<8x128xf32>
    %19 = arith.divf %17, %18 : vector<8x128xf32>
    %20 = arith.mulf %6, %13 : vector<8x128xf32>
    %21 = arith.mulf %7, %19 : vector<8x128xf32>
    %cst_7 = arith.constant 5.000000e-01 : f32
    %22 = vector.broadcast %cst_7 : f32 to vector<8x128xf32>
    %23 = arith.mulf %22, %21 : vector<8x128xf32>
    %24 = math.exp %23 : vector<8x128xf32>
    %c0_8 = arith.constant 0 : index
    %c0_9 = arith.constant 0 : index
    %25 = vector.load %arg4[%c0_8, %c0_9] : memref<8x128xbf16, #tpu.memory_space<vmem>>, vector<8x128xbf16>
    %26 = arith.extf %25 : vector<8x128xbf16> to vector<8x128xf32>
    %27 = arith.mulf %26, %24 : vector<8x128xf32>
    %28 = arith.addf %27, %20 : vector<8x128xf32>
    %c0_10 = arith.constant 0 : index
    %c0_11 = arith.constant 0 : index
    %29 = vector.load %arg5[%c0_10, %c0_11] : memref<8x384xf32, #tpu.memory_space<vmem>>, vector<8x128xf32>
    tpu.vector_store %arg5[%c0_10, %c0_11], %28 {strides = array<i32>} : memref<8x384xf32, #tpu.memory_space<vmem>>, vector<8x128xf32>,
    %c0_12 = arith.constant 0 : index
    %c128 = arith.constant 128 : index
    %30 = vector.load %arg5[%c0_12, %c128] : memref<8x384xf32, #tpu.memory_space<vmem>>, vector<8x128xf32>
    tpu.vector_store %arg5[%c0_12, %c128], %20 {strides = array<i32>} : memref<8x384xf32, #tpu.memory_space<vmem>>, vector<8x128xf32>,
    %c0_13 = arith.constant 0 : index
    %c256 = arith.constant 256 : index
    %31 = vector.load %arg5[%c0_13, %c256] : memref<8x384xf32, #tpu.memory_space<vmem>>, vector<8x128xf32>
    tpu.vector_store %arg5[%c0_13, %c256], %21 {strides = array<i32>} : memref<8x384xf32, #tpu.memory_space<vmem>>, vector<8x128xf32>,
    return
  }
  func.func @transform_0(%arg0: i32) -> (i32, i32) {
    %c0_i32 = arith.constant 0 : i32
    %c0_i32_0 = arith.constant 0 : i32
    return %arg0, %c0_i32 : i32, i32
  }
  func.func @transform_1(%arg0: i32) -> (i32, i32) {
    %c0_i32 = arith.constant 0 : i32
    %c0_i32_0 = arith.constant 0 : i32
    %c0_i32_1 = arith.constant 0 : i32
    return %c0_i32, %c0_i32_0 : i32, i32
  }
  func.func @transform_2(%arg0: i32) -> (i32, i32) {
    %c0_i32 = arith.constant 0 : i32
    %c0_i32_0 = arith.constant 0 : i32
    %c0_i32_1 = arith.constant 0 : i32
    return %c0_i32, %c0_i32_0 : i32, i32
  }
  func.func @transform_3(%arg0: i32) -> (i32, i32) {
    %c0_i32 = arith.constant 0 : i32
    %c0_i32_0 = arith.constant 0 : i32
    return %arg0, %c0_i32 : i32, i32
  }
  func.func @transform_4(%arg0: i32) -> (i32, i32) {
    %c0_i32 = arith.constant 0 : i32
    %c0_i32_0 = arith.constant 0 : i32
    return %arg0, %c0_i32 : i32, i32
  }
}

</mosaic_0001>

<llo_original>
// kernel: ca_net_forward.1
$region0: #{ca_net_forward.1}
  #allocation0 [shape = 'u32[]', space=smem, size = 0x4, offset = 0x4, fixed_abs, tag = 'smem constant byte address 0x4 - core index']
  #allocation1 [shape = 'u32[72,128]{1,0:T(1,128)}', space=vmem, size = 0x9000, scoped, tag = 'internal scratch']
  %s0 = inlined_call_operand.vmem [shape: bf16[8,32], index: 0, kind: input, shape index: {}]
  %s1 = inlined_call_operand.hbm [shape: bf16[32,512], index: 1, kind: input, shape index: {}]
  %s2 = inlined_call_operand.vmem [shape: f32[1,512], index: 2, kind: input, shape index: {}]
  %s3 = inlined_call_operand.vmem [shape: bf16[8,128], index: 3, kind: input, shape index: {}]
  %s4 = inlined_call_operand.vmem [shape: f32[8,384], index: 4, kind: output, shape index: {}]
  %s5 = sld [smem:[#allocation0]]
  $region30: #{ca_net_forward.1} parent=0
    _
  %s7 = ssub.s32 1, %s5
  %s8 = scalar_select 0, %s7, %s5
  $region1: #{ca_net_forward.1} parent=0
    #allocation2 [shape = 'u8[32768]{0}', space=vmem, size = 0x8000, scoped, tag = 'input window, operand 1, single buffered']
    #allocation3 [shape = 's32[1]{0}', space=sflag, size = 0x4, scoped, tag = 'scoped memory for ca_net_forward.1']
    %9 = vsyncpa [#allocation3], 0
    // Predicated region
    $region2: #{ca_net_forward.1} parent=1 // pred_check
      _
    $region3: #{ca_net_forward.1} parent=1 // pred_check_branch
      %11 = sbr.rel (0) target = $region5
    $region4: #{ca_net_forward.1} parent=1 // pred_region
      _
    $region5: #{ca_net_forward.1} parent=1 // pred_fallthru
      _
    // Predicated region
    $region6: #{ca_net_forward.1} parent=1 // pred_check
      _
    $region7: #{ca_net_forward.1} parent=1 // pred_check_branch
      %13 = sbr.rel (0) target = $region9
    $region8: #{ca_net_forward.1} parent=1 // pred_region
      %15 = vsyncadd [#allocation3], 0
      %s16 = sshll.u32 %s1, 4
      %s17 = int_to_ptr.hbm [resolvable:$true] %s16
      %s18 = sshll.u32 [#allocation2], 4
      %s19 = int_to_ptr.vmem [resolvable:$true] %s18
      %24 = dma.hbm_to_vmem [thread:$0]  %s17, 1024, %s19, [#allocation3], 256, 256, 16
    $region9: #{ca_net_forward.1} parent=1 // pred_fallthru
      _
    // Predicated region
    $region10: #{ca_net_forward.1} parent=1 // pred_check
      _
    $region11: #{ca_net_forward.1} parent=1 // pred_check_branch
      %26 = sbr.rel (0) target = $region13
    $region12: #{ca_net_forward.1} parent=1 // pred_region
      _
    $region13: #{ca_net_forward.1} parent=1 // pred_fallthru
      _
    // Predicated region
    $region14: #{ca_net_forward.1} parent=1 // pred_check
      _
    $region15: #{ca_net_forward.1} parent=1 // pred_check_branch
      %28 = sbr.rel (0) target = $region17
    $region16: #{ca_net_forward.1} parent=1 // pred_region
      _
    $region17: #{ca_net_forward.1} parent=1 // pred_fallthru
      _
    // Predicated region
    $region18: #{ca_net_forward.1} parent=1 // pred_check
      _
    $region19: #{ca_net_forward.1} parent=1 // pred_check_branch
      %30 = sbr.rel (0) target = $region21
    $region20: #{ca_net_forward.1} parent=1 // pred_region
      %32 = dma.done [#allocation3], 1024
    $region21: #{ca_net_forward.1} parent=1 // pred_fallthru
      _
    %v34 = vld [vmem:[%s0] sm:$0xf]
    %v35 = vld [vmem:[#allocation2] sm:$0xff]
    %v36 = vld [vmem:[#allocation2 + $0x8] sm:$0xff]
    %v37 = vld [vmem:[#allocation2 + $0x10] sm:$0xff]
    %v38 = vld [vmem:[#allocation2 + $0x18] sm:$0xff]
    %v39 = vld [vmem:[#allocation2 + $0x20] sm:$0xff]
    %v40 = vld [vmem:[#allocation2 + $0x28] sm:$0xff]
    %v41 = vld [vmem:[#allocation2 + $0x30] sm:$0xff]
    %v42 = vld [vmem:[#allocation2 + $0x38] sm:$0xff]
    %v43 = vld [vmem:[%s2] sm:$0xf]
    %v45 = vperm.slane %v43, 0
    %v46 = vperm.slane %v43, 1
    %v47 = vperm.slane %v43, 2
    %v48 = vperm.slane %v43, 3
    %v61 = vunpack.c.l.b16 %v35
    %v62 = vunpack.c.h.b16 %v35
    %v63 = vunpack.c.l.b16 %v36
    %v64 = vunpack.c.h.b16 %v36
    %v65 = vunpack.c.l.b16 %v37
    %v66 = vunpack.c.h.b16 %v37
    %v67 = vunpack.c.l.b16 %v38
    %v68 = vunpack.c.h.b16 %v38
    %v69 = vunpack.c.l.b16 %v39
    %v70 = vunpack.c.h.b16 %v39
    %v71 = vunpack.c.l.b16 %v40
    %v72 = vunpack.c.h.b16 %v40
    %v73 = vunpack.c.l.b16 %v41
    %v74 = vunpack.c.h.b16 %v41
    %v75 = vunpack.c.l.b16 %v42
    %v76 = vunpack.c.h.b16 %v42
    %v77 = vpack.c.b16 %v65, %v61
    %v78 = vpack.c.b16 %v66, %v62
    %v79 = vpack.c.b16 %v67, %v63
    %v80 = vpack.c.b16 %v68, %v64
    %v81 = vpack.c.b16 %v73, %v69
    %v82 = vpack.c.b16 %v74, %v70
    %v83 = vpack.c.b16 %v75, %v71
    %v84 = vpack.c.b16 %v76, %v72
    %vm93 = vcmask 261120
    %v95 = vsel %vm93, %v34, 0
    %97 = vmatpush.bf16.msra.mxu0 0
    %98 = vmatpush.bf16.msra.mxu0 0
    %99 = vmatpush.bf16.msra.mxu0 0
    %100 = vmatpush.bf16.msra.mxu0 0
    %101 = vmatpush.bf16.msra.mxu0 0
    %102 = vmatpush.bf16.msra.mxu0 0
    %103 = vmatpush.bf16.msra.mxu0 %v81
    %104 = vmatpush.bf16.msra.mxu0 %v77
    %105 = vmatmul.bf16.gmra.mxu0 %v95
    %v106 = vpop.f32.mrf.mxu0
    %v107 = vadd.f32 %v45, %v106
    %v108 = vpop.f32.mrf.mxu0
    %109 = vdwg.mxu0
    %110 = vmatpush.bf16.msra.mxu0 0
    %111 = vmatpush.bf16.msra.mxu0 0
    %112 = vmatpush.bf16.msra.mxu0 0
    %113 = vmatpush.bf16.msra.mxu0 0
    %114 = vmatpush.bf16.msra.mxu0 0
    %115 = vmatpush.bf16.msra.mxu0 0
    %116 = vmatpush.bf16.msra.mxu0 %v82
    %117 = vmatpush.bf16.msra.mxu0 %v78
    %118 = vmatmul.bf16.gmra.mxu0 %v95
    %v119 = vpop.f32.mrf.mxu0
    %v120 = vadd.f32 %v46, %v119
    %v121 = vpop.f32.mrf.mxu0
    %122 = vdwg.mxu0
    %123 = vmatpush.bf16.msra.mxu0 0
    %124 = vmatpush.bf16.msra.mxu0 0
    %125 = vmatpush.bf16.msra.mxu0 0
    %126 = vmatpush.bf16.msra.mxu0 0
    %127 = vmatpush.bf16.msra.mxu0 0
    %128 = vmatpush.bf16.msra.mxu0 0
    %129 = vmatpush.bf16.msra.mxu0 %v83
    %130 = vmatpush.bf16.msra.mxu0 %v79
    %131 = vmatmul.bf16.gmra.mxu0 %v95
    %v132 = vpop.f32.mrf.mxu0
    %v133 = vadd.f32 %v47, %v132
    %v134 = vpop.f32.mrf.mxu0
    %135 = vdwg.mxu0
    %136 = vmatpush.bf16.msra.mxu0 0
    %137 = vmatpush.bf16.msra.mxu0 0
    %138 = vmatpush.bf16.msra.mxu0 0
    %139 = vmatpush.bf16.msra.mxu0 0
    %140 = vmatpush.bf16.msra.mxu0 0
    %141 = vmatpush.bf16.msra.mxu0 0
    %142 = vmatpush.bf16.msra.mxu0 %v84
    %143 = vmatpush.bf16.msra.mxu0 %v80
    %144 = vmatmul.bf16.gmra.mxu0 %v95
    %v145 = vpop.f32.mrf.mxu0
    %v146 = vadd.f32 %v48, %v145
    %v147 = vpop.f32.mrf.mxu0
    %148 = vdwg.mxu0
    %v149 = vxor.u32 %v133, 2147483648
    %v150 = vmul.f32 %v149, 1.442695
    %v151 = vpow.pop %v150
    %v152 = vadd.f32 %v151, 1.0
    %v153 = vrcp.pop %v152
    %v154 = vmul.f32 %v152, %v153
    %v155 = vsub.f32 1.0, %v154
    %v156 = vmul.f32 %v153, %v155
    %v157 = vadd.f32 %v153, %v156
    %vm158 = vweird.f32 %v152
    %vm159 = vweird.f32 %v153
    %vm160 = vmor %vm158, %vm159
    %v161 = vsel %vm160, %v153, %v157
    %v162 = vand.u32 2147483647, %v152
    %vm163 = vcmp.eq.f32.partialorder %v162, 8.507059e+37
    %v164 = vand.u32 %v152, 2147483648
    %v165 = vor.u32 1.1754944e-38, %v164
    %v166 = vsel %vm163, %v165, %v161
    %v167 = vmul.f32 1.0, %v166
    %v168 = vxor.u32 %v146, 2147483648
    %v169 = vmul.f32 %v168, 1.442695
    %v170 = vpow.pop %v169
    %v171 = vadd.f32 %v170, 1.0
    %v172 = vrcp.pop %v171
    %v173 = vmul.f32 %v171, %v172
    %v174 = vsub.f32 1.0, %v173
    %v175 = vmul.f32 %v172, %v174
    %v176 = vadd.f32 %v172, %v175
    %vm177 = vweird.f32 %v171
    %vm178 = vweird.f32 %v172
    %vm179 = vmor %vm177, %vm178
    %v180 = vsel %vm179, %v172, %v176
    %v181 = vand.u32 2147483647, %v171
    %vm182 = vcmp.eq.f32.partialorder %v181, 8.507059e+37
    %v183 = vand.u32 %v171, 2147483648
    %v184 = vor.u32 1.1754944e-38, %v183
    %v185 = vsel %vm182, %v184, %v180
    %v186 = vmul.f32 1.0, %v185
    %v187 = vmul.f32 %v107, %v167
    %v188 = vmul.f32 %v120, %v186
    %v189 = vmul.f32 %v188, 0.5
    %v190 = vmul.f32 %v189, 1.442695
    %v191 = vpow.pop %v190
    %v192 = vld [vmem:[%s3] sm:$0xf]
    %v193 = vunpack.c.l.bf16 %v192
    %v194 = vmul.f32 %v193, %v191
    %v195 = vadd.f32 %v194, %v187
    %196 = vst [vmem:[%s4] sm:$0xff] %v195
    %197 = vst [vmem:[%s4 + $0x8] sm:$0xff] %v187
    %198 = vst [vmem:[%s4 + $0x10] sm:$0xff] %v188
    // Predicated region
    $region22: #{ca_net_forward.1} parent=1 // pred_check
      _
    $region23: #{ca_net_forward.1} parent=1 // pred_check_branch
      %200 = sbr.rel (0) target = $region25
    $region24: #{ca_net_forward.1} parent=1 // pred_region
      _
    $region25: #{ca_net_forward.1} parent=1 // pred_fallthru
      _
    // Predicated region
    $region26: #{ca_net_forward.1} parent=1 // pred_check
      _
    $region27: #{ca_net_forward.1} parent=1 // pred_check_branch
      %202 = sbr.rel (0) target = $region29
    $region28: #{ca_net_forward.1} parent=1 // pred_region
      _
    $region29: #{ca_net_forward.1} parent=1 // pred_fallthru
      _
    %203 = vsyncpa [#allocation3], 1

</llo_original>
